<compile_context>
chip_gen: v6e
topology: v6e:2x2x1
jax: 0.10.0
libtpu: 0.0.40
codegen_flags: <defaults>
</compile_context>

<pallas_src>
import functools

import jax
import jax.numpy as jnp
from jax import lax
from jax.experimental import pallas as pl
from jax.experimental.pallas import tpu as pltpu

_EPS = 1e-10

# murmur3 fmix32 constants, written as their two's-complement int32 values.
_FMIX_C1 = -2048144789   # 0x85EBCA6B
_FMIX_C2 = -1028477387   # 0xC2B2AE35
_GOLDEN = -1640531527    # 0x9E3779B9


def _shr(x, nbits):
    """Logical right shift of an int32 array by a static amount."""
    return lax.shift_right_logical(x, jnp.full(x.shape, nbits, x.dtype))


def _uniform_from_hash(idx, seed):
    """Stateless uniform in [0, 1) from (element index, seed).

    Plain integer VPU ops only, so it lowers on Mosaic and on the CPU
    interpreter (unlike pltpu.prng_* which broke rev 2).  int32 multiply
    overflow wraps (two's complement), which is what a hash wants.
    """
    x = jnp.bitwise_xor(idx, seed * jnp.int32(_GOLDEN))
    x = jnp.bitwise_xor(x, _shr(x, 16))
    x = x * jnp.int32(_FMIX_C1)
    x = jnp.bitwise_xor(x, _shr(x, 13))
    x = x * jnp.int32(_FMIX_C2)
    x = jnp.bitwise_xor(x, _shr(x, 16))
    # Exponent bit-trick: 23 random mantissa bits OR 1.0f, bitcast, minus 1.
    bits = jnp.bitwise_or(jnp.bitwise_and(x, jnp.int32(0x007FFFFF)),
                          jnp.int32(0x3F800000))
    return lax.bitcast_convert_type(bits, jnp.float32) - jnp.float32(1.0)


def _seg_reduce(x, seg, n_seg, reduce_fn, init):
    """Reduce each C-wide lane segment of every row; broadcast back to lanes.

    Implemented as n_seg masked full-row reductions plus selects.  Each
    reduction operates on whole (8,128) vregs, so the amortized cost is tiny
    (~0.1 op/element for n_seg=8) while every load/store/elementwise op in
    the kernel stays lane-dense.
    """
    if n_seg == 1:
        return reduce_fn(x, axis=-1, keepdims=True)
    init = jnp.asarray(init, x.dtype)
    out = jnp.zeros_like(x)
    for k in range(n_seg):
        mk = seg == k
        rk = reduce_fn(jnp.where(mk, x, init), axis=-1, keepdims=True)
        out = jnp.where(mk, rk, out)
    return out


def _gumbel_softmax_kernel(seed_ref, x_ref, o_ref, *, n_class, n_seg,
                           add_noise, hard, temperature, eps):
    rows, width = x_ref.shape            # width == n_seg * n_class (lane-dense)
    z = x_ref[...].astype(jnp.float32)

    lane = lax.broadcasted_iota(jnp.int32, (rows, width), 1)

    if add_noise:
        # Global flat element index equals the flat index of the original
        # (B, C) array (the fold is a row-major reshape), so the noise stream
        # is independent of tiling / folding / core sharding.
        row0 = pl.program_id(0) * rows
        row = lax.broadcasted_iota(jnp.int32, (rows, width), 0) + row0
        idx = row * jnp.int32(width) + lane
        u = _uniform_from_hash(idx, seed_ref[0])
        # gumbel = -log(eps - log(u + eps)), exactly as the torch reference.
        gumbel = -jnp.log(eps - jnp.log(u + eps))
        z = z + gumbel

    if temperature != 1.0:               # reference module hardcodes temp=1
        z = z * jnp.float32(1.0 / temperature)

    if n_seg > 1:
        # n_class is a power of two whenever we fold (128 % C == 0).
        shift = int(n_class).bit_length() - 1
        seg = _shr(lane, shift)                                # lane // C
        pos = jnp.bitwise_and(lane, jnp.int32(n_class - 1))    # lane %  C
    else:
        seg = jnp.zeros_like(lane)
        pos = lane

    m = _seg_reduce(z, seg, n_seg, jnp.max, -jnp.inf)          # per-row max

    if hard:
        # Softmax is monotone row-wise, so the straight-through forward value
        # is the one-hot of argmax(z); first index wins ties (torch argmax).
        big = jnp.int32(width)
        first = _seg_reduce(jnp.where(z == m, pos, big), seg, n_seg,
                            jnp.min, big)
        y = jnp.where(pos == first, jnp.float32(1.0), jnp.float32(0.0))
    else:
        e = jnp.exp(z - m)
        s = _seg_reduce(e, seg, n_seg, jnp.sum, 0.0)
        y = e / s            # exact normalizer (review: approx recip drifted)

    o_ref[...] = y.astype(o_ref.dtype)


def _fold_factor(n_rows, n_class):
    """Rows folded into the lane axis so kernel blocks are 128-lane dense.

    (B, C) -> (B//R, R*C) is a free row-major reshape (no HBM pass) when
    R*C == 128; otherwise fall back to the unfolded layout (R = 1).
    """
    if 0 < n_class < 128 and 128 % n_class == 0:
        r = 128 // n_class
        if n_rows % r == 0:
            return r
    return 1


def _pick_tile_rows(n_rows, width, target_bytes=1 << 20):
    """Rows per block, budgeted against the lane-PADDED f32 footprint.

    VMEM pads the minor dim to a multiple of 128 lanes, so use
    round_up(width, 128) (review item).  ~1 MiB per block keeps the
    double-buffered in+out plus full-block elementwise temporaries well under
    the explicit 32 MiB scoped-VMEM limit on v5e/v6e/v7x while staying in the
    1-4 MiB range where streaming kernels hit ~85% of the HBM roofline.
    """
    padded_w = max(128, ((width + 127) // 128) * 128)
    rows = max(8, target_bytes // (4 * padded_w))
    if rows >= n_rows:
        return n_rows
    return max(8, (rows // 8) * 8)


def _run_gumbel_softmax(logits, seed, *, add_noise, hard, temperature=1.0,
                        eps=_EPS, tile_rows=None, core_parallel=False):
    B, C = logits.shape
    r = _fold_factor(B, C)
    x = logits.reshape(B // r, r * C) if r > 1 else logits
    n_rows, width = x.shape

    tb = tile_rows if tile_rows is not None else _pick_tile_rows(n_rows, width)
    tb = n_rows if tb >= n_rows else max(8, (tb // 8) * 8)
    grid = (pl.cdiv(n_rows, tb),)

    # On v7x pass core_parallel=True to shard the batch axis across the two
    # TensorCores (review item); "parallel" is the default because it is safe
    # on every generation.
    batch_sem = pltpu.CORE_PARALLEL if core_parallel else "parallel"

    kernel = functools.partial(
        _gumbel_softmax_kernel, n_class=C, n_seg=r,
        add_noise=add_noise, hard=hard,
        temperature=float(temperature), eps=float(eps))

    out = pl.pallas_call(
        kernel,
        out_shape=jax.ShapeDtypeStruct((n_rows, width), logits.dtype),
        grid_spec=pltpu.PrefetchScalarGridSpec(
            num_scalar_prefetch=1,       # 4-byte seed in SMEM, no noise stream
            grid=grid,
            in_specs=[pl.BlockSpec((tb, width), lambda i, seed_ref: (i, 0))],
            out_specs=pl.BlockSpec((tb, width), lambda i, seed_ref: (i, 0)),
        ),
        compiler_params=pltpu.CompilerParams(
            dimension_semantics=(batch_sem,),
            vmem_limit_bytes=32 * 1024 * 1024),   # v5e default is only 16 MiB
    )(seed, x)

    return out.reshape(B, C) if r > 1 else out


def _derive_seed(key):
    return jax.random.randint(key, (1,), 0, jnp.iinfo(jnp.int32).max,
                              dtype=jnp.int32)


def _reference_soft(logits, seed, eps=_EPS):
    """Pure-JAX reference (same hash noise) used only for testing."""
    B, C = logits.shape
    idx = jnp.arange(B * C, dtype=jnp.int32).reshape(B, C)
    u = _uniform_from_hash(idx, seed[0])
    g = -jnp.log(eps - jnp.log(u + eps))
    return jax.nn.softmax(logits + g, axis=-1)


class GumbelSoftmax:
    """JAX/Pallas port of the PyTorch GumbelSoftmax module (forward only)."""
    # TODO(synk): the straight-through gradient (y_hard - y.detach() + y) is a
    # backward-pass construct; only the forward value is implemented here.

    def __init__(self, hard=False, tile_rows=None, core_parallel=False):
        self.hard = hard                  # kept for parity with the reference
        self.training = True              # nn.Module default
        self.tile_rows = tile_rows        # folded-rows-per-block override
        self.core_parallel = core_parallel

    def train(self):
        self.training = True
        return self

    def eval(self):
        self.training = False
        return self

    def __call__(self, logits, key, temp=1, force_hard=False):
        # The reference forward ignores `temp` and always uses temperature=1.
        hard = not (self.training and (not force_hard))
        add_noise = self.training         # mirrors gumbel_softmax_sample
        seed = _derive_seed(key)
        return _run_gumbel_softmax(logits, seed, add_noise=add_noise,
                                   hard=hard, temperature=1.0,
                                   tile_rows=self.tile_rows,
                                   core_parallel=self.core_parallel)


if __name__ == "__main__":
    key = jax.random.PRNGKey(0)
    k_logits, k_noise1, k_noise2, k_big = jax.random.split(key, 4)

    batch, n_class = 24, 16
    logits = jax.random.normal(k_logits, (batch, n_class), dtype=jnp.float32)
    mod = GumbelSoftmax()

    # Training-mode soft sample: lane-dense folded layout, exact normalizer.
    y_soft = jax.block_until_ready(mod(logits, k_noise1))
    assert y_soft.shape == (batch, n_class)
    assert bool(jnp.all(y_soft >= 0.0))
    assert jnp.allclose(jnp.sum(y_soft, axis=-1), 1.0, atol=1e-5)
    assert jnp.allclose(y_soft, _reference_soft(logits, _derive_seed(k_noise1)),
                        atol=1e-4)

    # Training-mode forced-hard sample: one-hot of argmax(logits + noise).
    y_fhard = jax.block_until_ready(mod(logits, k_noise1, force_hard=True))
    assert jnp.allclose(jnp.sum(y_fhard, axis=-1), 1.0)
    assert bool(jnp.all(jnp.max(y_fhard, axis=-1) == 1.0))
    noisy = logits + (-jnp.log(_EPS - jnp.log(
        _uniform_from_hash(jnp.arange(batch * n_class, dtype=jnp.int32)
                           .reshape(batch, n_class),
                           _derive_seed(k_noise1)[0]) + _EPS)))
    picked = jnp.take_along_axis(
        noisy, jnp.argmax(y_fhard, axis=-1, keepdims=True), axis=-1)
    assert bool(jnp.all(picked >= jnp.max(noisy, axis=-1, keepdims=True) - 1e-4))

    # Eval-mode hard sample: one-hot of argmax(logits), no noise, exact.
    mod.eval()
    y_hard = jax.block_until_ready(mod(logits, k_noise2))
    assert jnp.allclose(jnp.sum(y_hard, axis=-1), 1.0)
    assert jnp.array_equal(jnp.argmax(y_hard, axis=-1),
                           jnp.argmax(logits, axis=-1))

    # Multi-block grid over the folded layout: 256 rows -> 32 folded rows,
    # 8-row tiles -> grid=(4,).  (Production uses the auto tile picker; the
    # small override is only to exercise the pipelined multi-block path.)
    big_logits = jax.random.normal(k_big, (256, n_class), dtype=jnp.float32)
    mod_big = GumbelSoftmax(tile_rows=8)
    y_big = jax.block_until_ready(mod_big(big_logits, k_noise2))
    assert jnp.allclose(jnp.sum(y_big, axis=-1), 1.0, atol=1e-5)
    assert jnp.allclose(y_big, _reference_soft(big_logits, _derive_seed(k_noise2)),
                        atol=1e-4)
    y_big_h = jax.block_until_ready(mod_big.eval()(big_logits, k_noise2))
    assert jnp.array_equal(jnp.argmax(y_big_h, axis=-1),
                           jnp.argmax(big_logits, axis=-1))

    # Unfolded fallback path (C does not divide 128).
    odd_logits = jax.random.normal(k_noise1, (16, 10), dtype=jnp.float32)
    y_odd = jax.block_until_ready(GumbelSoftmax()(odd_logits, k_noise2))
    assert y_odd.shape == (16, 10)
    assert jnp.allclose(jnp.sum(y_odd, axis=-1), 1.0, atol=1e-5)

    print("KERNEL_OK")
</pallas_src>

<mosaic_0001>
module attributes {stable_mosaic.version = 11 : i64} {
  func.func @_gumbel_softmax_kernel(%arg0: i32, %arg1: memref<1xi32, #tpu.memory_space<smem>>, %arg2: memref<3x128xf32, #tpu.memory_space<vmem>>, %arg3: memref<3x128xf32, #tpu.memory_space<vmem>>) attributes {dimension_semantics = [#tpu.dimension_semantics<parallel>], iteration_bounds = array<i64: 1>, scalar_prefetch = 1 : i64, scratch_operands = 0 : i64, tpu.core_type = #tpu.core_type<tc>, window_params = [{transform_indices = @transform_0, window_bounds = array<i64: 3, 128>}, {transform_indices = @transform_1, window_bounds = array<i64: 3, 128>}]} {
    %c0 = arith.constant 0 : index
    %c0_0 = arith.constant 0 : index
    %0 = vector.load %arg2[%c0, %c0_0] : memref<3x128xf32, #tpu.memory_space<vmem>>, vector<3x128xf32>
    %1 = tpu.iota {dimensions = array<i32: 1>} : vector<3x128xi32>
    %c3_i32 = arith.constant 3 : i32
    %2 = arith.muli %arg0, %c3_i32 : i32
    %3 = tpu.iota {dimensions = array<i32: 0>} : vector<3x128xi32>
    %4 = vector.broadcast %2 : i32 to vector<3x128xi32>
    %5 = arith.addi %3, %4 : vector<3x128xi32>
    %c128_i32 = arith.constant 128 : i32
    %6 = vector.broadcast %c128_i32 : i32 to vector<3x128xi32>
    %7 = arith.muli %5, %6 : vector<3x128xi32>
    %8 = arith.addi %7, %1 : vector<3x128xi32>
    %c0_1 = arith.constant 0 : index
    %9 = memref.load %arg1[%c0_1] : memref<1xi32, #tpu.memory_space<smem>>
    %c-1640531527_i32 = arith.constant -1640531527 : i32
    %10 = arith.muli %9, %c-1640531527_i32 : i32
    %11 = vector.broadcast %10 : i32 to vector<3x128xi32>
    %12 = arith.xori %8, %11 : vector<3x128xi32>
    %c16_i32 = arith.constant 16 : i32
    %13 = vector.broadcast %c16_i32 : i32 to vector<3x128xi32>
    %14 = arith.shrui %12, %13 : vector<3x128xi32>
    %15 = arith.xori %12, %14 : vector<3x128xi32>
    %c-2048144789_i32 = arith.constant -2048144789 : i32
    %16 = vector.broadcast %c-2048144789_i32 : i32 to vector<3x128xi32>
    %17 = arith.muli %15, %16 : vector<3x128xi32>
    %c13_i32 = arith.constant 13 : i32
    %18 = vector.broadcast %c13_i32 : i32 to vector<3x128xi32>
    %19 = arith.shrui %17, %18 : vector<3x128xi32>
    %20 = arith.xori %17, %19 : vector<3x128xi32>
    %c-1028477387_i32 = arith.constant -1028477387 : i32
    %21 = vector.broadcast %c-1028477387_i32 : i32 to vector<3x128xi32>
    %22 = arith.muli %20, %21 : vector<3x128xi32>
    %c16_i32_2 = arith.constant 16 : i32
    %23 = vector.broadcast %c16_i32_2 : i32 to vector<3x128xi32>
    %24 = arith.shrui %22, %23 : vector<3x128xi32>
    %25 = arith.xori %22, %24 : vector<3x128xi32>
    %c8388607_i32 = arith.constant 8388607 : i32
    %26 = vector.broadcast %c8388607_i32 : i32 to vector<3x128xi32>
    %27 = arith.andi %25, %26 : vector<3x128xi32>
    %c1065353216_i32 = arith.constant 1065353216 : i32
    %28 = vector.broadcast %c1065353216_i32 : i32 to vector<3x128xi32>
    %29 = arith.ori %27, %28 : vector<3x128xi32>
    %30 = tpu.bitcast %29 : vector<3x128xi32> -> vector<3x128xf32>
    %cst = arith.constant 1.000000e+00 : f32
    %31 = vector.broadcast %cst : f32 to vector<3x128xf32>
    %32 = arith.subf %30, %31 : vector<3x128xf32>
    %cst_3 = arith.constant 1.000000e-10 : f32
    %33 = vector.broadcast %cst_3 : f32 to vector<3x128xf32>
    %34 = arith.addf %32, %33 : vector<3x128xf32>
    %35 = math.log %34 : vector<3x128xf32>
    %cst_4 = arith.constant 1.000000e-10 : f32
    %36 = vector.broadcast %cst_4 : f32 to vector<3x128xf32>
    %37 = arith.subf %36, %35 : vector<3x128xf32>
    %38 = math.log %37 : vector<3x128xf32>
    %cst_5 = arith.constant 0.000000e+00 : f32
    %39 = vector.broadcast %cst_5 : f32 to vector<3x128xf32>
    %40 = arith.subf %39, %38 : vector<3x128xf32>
    %41 = arith.addf %0, %40 : vector<3x128xf32>
    %c4_i32 = arith.constant 4 : i32
    %42 = vector.broadcast %c4_i32 : i32 to vector<3x128xi32>
    %43 = arith.shrui %1, %42 : vector<3x128xi32>
    %cst_6 = arith.constant 0.000000e+00 : f32
    %44 = vector.broadcast %cst_6 : f32 to vector<3x128xf32>
    %c0_i32 = arith.constant 0 : i32
    %45 = vector.broadcast %c0_i32 : i32 to vector<3x128xi32>
    %46 = arith.cmpi eq, %43, %45 : vector<3x128xi32>
    %cst_7 = arith.constant 0xFF800000 : f32
    %47 = vector.broadcast %cst_7 : f32 to vector<3x128xf32>
    %48 = arith.select %46, %41, %47 : vector<3x128xi1>, vector<3x128xf32>
    %cst_8 = arith.constant dense<0xFF800000> : vector<3xf32>
    %49 = vector.multi_reduction <maximumf>, %48, %cst_8 [1] : vector<3x128xf32> to vector<3xf32>
    %50 = vector.shape_cast %49 : vector<3xf32> to vector<3x1xf32>
    %51 = vector.shape_cast %50 : vector<3x1xf32> to vector<3x1xf32>
    %52 = vector.broadcast %51 : vector<3x1xf32> to vector<3x128xf32>
    %53 = arith.select %46, %52, %44 : vector<3x128xi1>, vector<3x128xf32>
    %c1_i32 = arith.constant 1 : i32
    %54 = vector.broadcast %c1_i32 : i32 to vector<3x128xi32>
    %55 = arith.cmpi eq, %43, %54 : vector<3x128xi32>
    %cst_9 = arith.constant 0xFF800000 : f32
    %56 = vector.broadcast %cst_9 : f32 to vector<3x128xf32>
    %57 = arith.select %55, %41, %56 : vector<3x128xi1>, vector<3x128xf32>
    %cst_10 = arith.constant dense<0xFF800000> : vector<3xf32>
    %58 = vector.multi_reduction <maximumf>, %57, %cst_10 [1] : vector<3x128xf32> to vector<3xf32>
    %59 = vector.shape_cast %58 : vector<3xf32> to vector<3x1xf32>
    %60 = vector.shape_cast %59 : vector<3x1xf32> to vector<3x1xf32>
    %61 = vector.broadcast %60 : vector<3x1xf32> to vector<3x128xf32>
    %62 = arith.select %55, %61, %53 : vector<3x128xi1>, vector<3x128xf32>
    %c2_i32 = arith.constant 2 : i32
    %63 = vector.broadcast %c2_i32 : i32 to vector<3x128xi32>
    %64 = arith.cmpi eq, %43, %63 : vector<3x128xi32>
    %cst_11 = arith.constant 0xFF800000 : f32
    %65 = vector.broadcast %cst_11 : f32 to vector<3x128xf32>
    %66 = arith.select %64, %41, %65 : vector<3x128xi1>, vector<3x128xf32>
    %cst_12 = arith.constant dense<0xFF800000> : vector<3xf32>
    %67 = vector.multi_reduction <maximumf>, %66, %cst_12 [1] : vector<3x128xf32> to vector<3xf32>
    %68 = vector.shape_cast %67 : vector<3xf32> to vector<3x1xf32>
    %69 = vector.shape_cast %68 : vector<3x1xf32> to vector<3x1xf32>
    %70 = vector.broadcast %69 : vector<3x1xf32> to vector<3x128xf32>
    %71 = arith.select %64, %70, %62 : vector<3x128xi1>, vector<3x128xf32>
    %c3_i32_13 = arith.constant 3 : i32
    %72 = vector.broadcast %c3_i32_13 : i32 to vector<3x128xi32>
    %73 = arith.cmpi eq, %43, %72 : vector<3x128xi32>
    %cst_14 = arith.constant 0xFF800000 : f32
    %74 = vector.broadcast %cst_14 : f32 to vector<3x128xf32>
    %75 = arith.select %73, %41, %74 : vector<3x128xi1>, vector<3x128xf32>
    %cst_15 = arith.constant dense<0xFF800000> : vector<3xf32>
    %76 = vector.multi_reduction <maximumf>, %75, %cst_15 [1] : vector<3x128xf32> to vector<3xf32>
    %77 = vector.shape_cast %76 : vector<3xf32> to vector<3x1xf32>
    %78 = vector.shape_cast %77 : vector<3x1xf32> to vector<3x1xf32>
    %79 = vector.broadcast %78 : vector<3x1xf32> to vector<3x128xf32>
    %80 = arith.select %73, %79, %71 : vector<3x128xi1>, vector<3x128xf32>
    %c4_i32_16 = arith.constant 4 : i32
    %81 = vector.broadcast %c4_i32_16 : i32 to vector<3x128xi32>
    %82 = arith.cmpi eq, %43, %81 : vector<3x128xi32>
    %cst_17 = arith.constant 0xFF800000 : f32
    %83 = vector.broadcast %cst_17 : f32 to vector<3x128xf32>
    %84 = arith.select %82, %41, %83 : vector<3x128xi1>, vector<3x128xf32>
    %cst_18 = arith.constant dense<0xFF800000> : vector<3xf32>
    %85 = vector.multi_reduction <maximumf>, %84, %cst_18 [1] : vector<3x128xf32> to vector<3xf32>
    %86 = vector.shape_cast %85 : vector<3xf32> to vector<3x1xf32>
    %87 = vector.shape_cast %86 : vector<3x1xf32> to vector<3x1xf32>
    %88 = vector.broadcast %87 : vector<3x1xf32> to vector<3x128xf32>
    %89 = arith.select %82, %88, %80 : vector<3x128xi1>, vector<3x128xf32>
    %c5_i32 = arith.constant 5 : i32
    %90 = vector.broadcast %c5_i32 : i32 to vector<3x128xi32>
    %91 = arith.cmpi eq, %43, %90 : vector<3x128xi32>
    %cst_19 = arith.constant 0xFF800000 : f32
    %92 = vector.broadcast %cst_19 : f32 to vector<3x128xf32>
    %93 = arith.select %91, %41, %92 : vector<3x128xi1>, vector<3x128xf32>
    %cst_20 = arith.constant dense<0xFF800000> : vector<3xf32>
    %94 = vector.multi_reduction <maximumf>, %93, %cst_20 [1] : vector<3x128xf32> to vector<3xf32>
    %95 = vector.shape_cast %94 : vector<3xf32> to vector<3x1xf32>
    %96 = vector.shape_cast %95 : vector<3x1xf32> to vector<3x1xf32>
    %97 = vector.broadcast %96 : vector<3x1xf32> to vector<3x128xf32>
    %98 = arith.select %91, %97, %89 : vector<3x128xi1>, vector<3x128xf32>
    %c6_i32 = arith.constant 6 : i32
    %99 = vector.broadcast %c6_i32 : i32 to vector<3x128xi32>
    %100 = arith.cmpi eq, %43, %99 : vector<3x128xi32>
    %cst_21 = arith.constant 0xFF800000 : f32
    %101 = vector.broadcast %cst_21 : f32 to vector<3x128xf32>
    %102 = arith.select %100, %41, %101 : vector<3x128xi1>, vector<3x128xf32>
    %cst_22 = arith.constant dense<0xFF800000> : vector<3xf32>
    %103 = vector.multi_reduction <maximumf>, %102, %cst_22 [1] : vector<3x128xf32> to vector<3xf32>
    %104 = vector.shape_cast %103 : vector<3xf32> to vector<3x1xf32>
    %105 = vector.shape_cast %104 : vector<3x1xf32> to vector<3x1xf32>
    %106 = vector.broadcast %105 : vector<3x1xf32> to vector<3x128xf32>
    %107 = arith.select %100, %106, %98 : vector<3x128xi1>, vector<3x128xf32>
    %c7_i32 = arith.constant 7 : i32
    %108 = vector.broadcast %c7_i32 : i32 to vector<3x128xi32>
    %109 = arith.cmpi eq, %43, %108 : vector<3x128xi32>
    %cst_23 = arith.constant 0xFF800000 : f32
    %110 = vector.broadcast %cst_23 : f32 to vector<3x128xf32>
    %111 = arith.select %109, %41, %110 : vector<3x128xi1>, vector<3x128xf32>
    %cst_24 = arith.constant dense<0xFF800000> : vector<3xf32>
    %112 = vector.multi_reduction <maximumf>, %111, %cst_24 [1] : vector<3x128xf32> to vector<3xf32>
    %113 = vector.shape_cast %112 : vector<3xf32> to vector<3x1xf32>
    %114 = vector.shape_cast %113 : vector<3x1xf32> to vector<3x1xf32>
    %115 = vector.broadcast %114 : vector<3x1xf32> to vector<3x128xf32>
    %116 = arith.select %109, %115, %107 : vector<3x128xi1>, vector<3x128xf32>
    %117 = arith.subf %41, %116 : vector<3x128xf32>
    %118 = math.exp %117 : vector<3x128xf32>
    %cst_25 = arith.constant 0.000000e+00 : f32
    %119 = vector.broadcast %cst_25 : f32 to vector<3x128xf32>
    %c0_i32_26 = arith.constant 0 : i32
    %120 = vector.broadcast %c0_i32_26 : i32 to vector<3x128xi32>
    %121 = arith.cmpi eq, %43, %120 : vector<3x128xi32>
    %cst_27 = arith.constant 0.000000e+00 : f32
    %122 = vector.broadcast %cst_27 : f32 to vector<3x128xf32>
    %123 = arith.select %121, %118, %122 : vector<3x128xi1>, vector<3x128xf32>
    %cst_28 = arith.constant dense<0.000000e+00> : vector<3xf32>
    %124 = vector.multi_reduction <add>, %123, %cst_28 [1] : vector<3x128xf32> to vector<3xf32>
    %125 = vector.shape_cast %124 : vector<3xf32> to vector<3x1xf32>
    %126 = vector.shape_cast %125 : vector<3x1xf32> to vector<3x1xf32>
    %127 = vector.broadcast %126 : vector<3x1xf32> to vector<3x128xf32>
    %128 = arith.select %121, %127, %119 : vector<3x128xi1>, vector<3x128xf32>
    %c1_i32_29 = arith.constant 1 : i32
    %129 = vector.broadcast %c1_i32_29 : i32 to vector<3x128xi32>
    %130 = arith.cmpi eq, %43, %129 : vector<3x128xi32>
    %cst_30 = arith.constant 0.000000e+00 : f32
    %131 = vector.broadcast %cst_30 : f32 to vector<3x128xf32>
    %132 = arith.select %130, %118, %131 : vector<3x128xi1>, vector<3x128xf32>
    %cst_31 = arith.constant dense<0.000000e+00> : vector<3xf32>
    %133 = vector.multi_reduction <add>, %132, %cst_31 [1] : vector<3x128xf32> to vector<3xf32>
    %134 = vector.shape_cast %133 : vector<3xf32> to vector<3x1xf32>
    %135 = vector.shape_cast %134 : vector<3x1xf32> to vector<3x1xf32>
    %136 = vector.broadcast %135 : vector<3x1xf32> to vector<3x128xf32>
    %137 = arith.select %130, %136, %128 : vector<3x128xi1>, vector<3x128xf32>
    %c2_i32_32 = arith.constant 2 : i32
    %138 = vector.broadcast %c2_i32_32 : i32 to vector<3x128xi32>
    %139 = arith.cmpi eq, %43, %138 : vector<3x128xi32>
    %cst_33 = arith.constant 0.000000e+00 : f32
    %140 = vector.broadcast %cst_33 : f32 to vector<3x128xf32>
    %141 = arith.select %139, %118, %140 : vector<3x128xi1>, vector<3x128xf32>
    %cst_34 = arith.constant dense<0.000000e+00> : vector<3xf32>
    %142 = vector.multi_reduction <add>, %141, %cst_34 [1] : vector<3x128xf32> to vector<3xf32>
    %143 = vector.shape_cast %142 : vector<3xf32> to vector<3x1xf32>
    %144 = vector.shape_cast %143 : vector<3x1xf32> to vector<3x1xf32>
    %145 = vector.broadcast %144 : vector<3x1xf32> to vector<3x128xf32>
    %146 = arith.select %139, %145, %137 : vector<3x128xi1>, vector<3x128xf32>
    %c3_i32_35 = arith.constant 3 : i32
    %147 = vector.broadcast %c3_i32_35 : i32 to vector<3x128xi32>
    %148 = arith.cmpi eq, %43, %147 : vector<3x128xi32>
    %cst_36 = arith.constant 0.000000e+00 : f32
    %149 = vector.broadcast %cst_36 : f32 to vector<3x128xf32>
    %150 = arith.select %148, %118, %149 : vector<3x128xi1>, vector<3x128xf32>
    %cst_37 = arith.constant dense<0.000000e+00> : vector<3xf32>
    %151 = vector.multi_reduction <add>, %150, %cst_37 [1] : vector<3x128xf32> to vector<3xf32>
    %152 = vector.shape_cast %151 : vector<3xf32> to vector<3x1xf32>
    %153 = vector.shape_cast %152 : vector<3x1xf32> to vector<3x1xf32>
    %154 = vector.broadcast %153 : vector<3x1xf32> to vector<3x128xf32>
    %155 = arith.select %148, %154, %146 : vector<3x128xi1>, vector<3x128xf32>
    %c4_i32_38 = arith.constant 4 : i32
    %156 = vector.broadcast %c4_i32_38 : i32 to vector<3x128xi32>
    %157 = arith.cmpi eq, %43, %156 : vector<3x128xi32>
    %cst_39 = arith.constant 0.000000e+00 : f32
    %158 = vector.broadcast %cst_39 : f32 to vector<3x128xf32>
    %159 = arith.select %157, %118, %158 : vector<3x128xi1>, vector<3x128xf32>
    %cst_40 = arith.constant dense<0.000000e+00> : vector<3xf32>
    %160 = vector.multi_reduction <add>, %159, %cst_40 [1] : vector<3x128xf32> to vector<3xf32>
    %161 = vector.shape_cast %160 : vector<3xf32> to vector<3x1xf32>
    %162 = vector.shape_cast %161 : vector<3x1xf32> to vector<3x1xf32>
    %163 = vector.broadcast %162 : vector<3x1xf32> to vector<3x128xf32>
    %164 = arith.select %157, %163, %155 : vector<3x128xi1>, vector<3x128xf32>
    %c5_i32_41 = arith.constant 5 : i32
    %165 = vector.broadcast %c5_i32_41 : i32 to vector<3x128xi32>
    %166 = arith.cmpi eq, %43, %165 : vector<3x128xi32>
    %cst_42 = arith.constant 0.000000e+00 : f32
    %167 = vector.broadcast %cst_42 : f32 to vector<3x128xf32>
    %168 = arith.select %166, %118, %167 : vector<3x128xi1>, vector<3x128xf32>
    %cst_43 = arith.constant dense<0.000000e+00> : vector<3xf32>
    %169 = vector.multi_reduction <add>, %168, %cst_43 [1] : vector<3x128xf32> to vector<3xf32>
    %170 = vector.shape_cast %169 : vector<3xf32> to vector<3x1xf32>
    %171 = vector.shape_cast %170 : vector<3x1xf32> to vector<3x1xf32>
    %172 = vector.broadcast %171 : vector<3x1xf32> to vector<3x128xf32>
    %173 = arith.select %166, %172, %164 : vector<3x128xi1>, vector<3x128xf32>
    %c6_i32_44 = arith.constant 6 : i32
    %174 = vector.broadcast %c6_i32_44 : i32 to vector<3x128xi32>
    %175 = arith.cmpi eq, %43, %174 : vector<3x128xi32>
    %cst_45 = arith.constant 0.000000e+00 : f32
    %176 = vector.broadcast %cst_45 : f32 to vector<3x128xf32>
    %177 = arith.select %175, %118, %176 : vector<3x128xi1>, vector<3x128xf32>
    %cst_46 = arith.constant dense<0.000000e+00> : vector<3xf32>
    %178 = vector.multi_reduction <add>, %177, %cst_46 [1] : vector<3x128xf32> to vector<3xf32>
    %179 = vector.shape_cast %178 : vector<3xf32> to vector<3x1xf32>
    %180 = vector.shape_cast %179 : vector<3x1xf32> to vector<3x1xf32>
    %181 = vector.broadcast %180 : vector<3x1xf32> to vector<3x128xf32>
    %182 = arith.select %175, %181, %173 : vector<3x128xi1>, vector<3x128xf32>
    %c7_i32_47 = arith.constant 7 : i32
    %183 = vector.broadcast %c7_i32_47 : i32 to vector<3x128xi32>
    %184 = arith.cmpi eq, %43, %183 : vector<3x128xi32>
    %cst_48 = arith.constant 0.000000e+00 : f32
    %185 = vector.broadcast %cst_48 : f32 to vector<3x128xf32>
    %186 = arith.select %184, %118, %185 : vector<3x128xi1>, vector<3x128xf32>
    %cst_49 = arith.constant dense<0.000000e+00> : vector<3xf32>
    %187 = vector.multi_reduction <add>, %186, %cst_49 [1] : vector<3x128xf32> to vector<3xf32>
    %188 = vector.shape_cast %187 : vector<3xf32> to vector<3x1xf32>
    %189 = vector.shape_cast %188 : vector<3x1xf32> to vector<3x1xf32>
    %190 = vector.broadcast %189 : vector<3x1xf32> to vector<3x128xf32>
    %191 = arith.select %184, %190, %182 : vector<3x128xi1>, vector<3x128xf32>
    %192 = arith.divf %118, %191 : vector<3x128xf32>
    %c0_50 = arith.constant 0 : index
    %c0_51 = arith.constant 0 : index
    %193 = vector.load %arg3[%c0_50, %c0_51] : memref<3x128xf32, #tpu.memory_space<vmem>>, vector<3x128xf32>
    tpu.vector_store %arg3[%c0_50, %c0_51], %192 {strides = array<i32>} : memref<3x128xf32, #tpu.memory_space<vmem>>, vector<3x128xf32>,
    return
  }
  func.func @transform_0(%arg0: i32, %arg1: memref<1xi32, #tpu.memory_space<smem>>) -> (i32, i32) {
    %c0_i32 = arith.constant 0 : i32
    %c0_i32_0 = arith.constant 0 : i32
    return %arg0, %c0_i32 : i32, i32
  }
  func.func @transform_1(%arg0: i32, %arg1: memref<1xi32, #tpu.memory_space<smem>>) -> (i32, i32) {
    %c0_i32 = arith.constant 0 : i32
    %c0_i32_0 = arith.constant 0 : i32
    return %arg0, %c0_i32 : i32, i32
  }
}

</mosaic_0001>

<llo_original>
// kernel: tpu_custom_call.1
$region0: #{tpu_custom_call.1}
  #allocation0 [shape = 'u32[]', space=smem, size = 0x4, offset = 0x4, fixed_abs, tag = 'smem constant byte address 0x4 - core index']
  #allocation1 [shape = 'u32[144,128]{1,0:T(1,128)}', space=vmem, size = 0x12000, scoped, tag = 'internal scratch']
  #allocation2 [shape = 's32[1]{0}', space=sflag, size = 0x4, scoped, tag = 'scoped memory for tpu_custom_call.1']
  #allocation3 [shape = 's32[1]{0:T(128)S(6)}', space=smem, size = 0x200, scoped, tag = 'prefetched SMEM operand 0']
  %s0 = inlined_call_operand.<no memory space> [shape: s32[1], index: 0, kind: input, shape index: {}]
  %s1 = inlined_call_operand.hbm [shape: f32[3,128], index: 1, kind: input, shape index: {}]
  %s2 = inlined_call_operand.hbm [shape: f32[3,128], index: 2, kind: output, shape index: {}]
  %s3 = sld [smem:[#allocation0]]
  $region18: #{tpu_custom_call.1} parent=0
    _
  %s5 = ssub.s32 1, %s3
  %s6 = scalar_select 0, %s5, %s3
  %7 = sst [smem:[#allocation3]] %s0
  $region1: #{tpu_custom_call.1} parent=0
    #allocation4 [shape = 'u8[2048]{0}', space=vmem, size = 0x800, scoped, tag = 'input window, operand 1, single buffered']
    #allocation5 [shape = 's32[1]{0}', space=sflag, size = 0x4, scoped, tag = 'scoped memory for tpu_custom_call.1']
    #allocation6 [shape = 's32[1]{0}', space=sflag, size = 0x4, scoped, tag = 'scoped memory for tpu_custom_call.1']
    #allocation7 [shape = 'u8[2048]{0}', space=vmem, size = 0x800, scoped, tag = 'output window, operand 0, single buffered']
    %8 = vsyncpa [#allocation5], 0
    %9 = vsyncpa [#allocation6], 0
    // Predicated region
    $region2: #{tpu_custom_call.1} parent=1 // pred_check
      _
    $region3: #{tpu_custom_call.1} parent=1 // pred_check_branch
      %11 = sbr.rel (0) target = $region5
    $region4: #{tpu_custom_call.1} parent=1 // pred_region
      %s13 = ssub.s32 64, 64
      %14 = vsyncadd [#allocation5], %s13
      %s16 = sshll.u32 [#allocation4], 4
      %s17 = int_to_ptr.vmem [resolvable:$true] %s16
      %19 = dma.hbm_to_vmem [thread:$0]  %s1, 64, %s17, [#allocation5]
    $region5: #{tpu_custom_call.1} parent=1 // pred_fallthru
      _
    // Predicated region
    $region6: #{tpu_custom_call.1} parent=1 // pred_check
      _
    $region7: #{tpu_custom_call.1} parent=1 // pred_check_branch
      %21 = sbr.rel (0) target = $region9
    $region8: #{tpu_custom_call.1} parent=1 // pred_region
      %22 = dma.done [#allocation5], 64
    $region9: #{tpu_custom_call.1} parent=1 // pred_fallthru
      _
    %v23 = vld [vmem:[#allocation4] sm:$0x7]
    %v24 = vlaneseq
    %v25 = vand.u32 %v24, 127
    %s26 = smul.u32 0, 3
    %v27 = vlaneseq
    %v28 = vshrl.u32 %v27, 7
    %v29 = vstv %s26
    %v30 = vadd.s32 %v28, %v29
    %v31 = vmul.u32 %v30, 128
    %v32 = vadd.s32 %v31, %v25
    %s33 = sld [smem:[#allocation3]]
    %s34 = smul.u32 %s33, 2654435769
    %v35 = vstv %s34
    %v36 = vxor.u32 %v32, %v35
    %v37 = vshrl.u32 %v36, 16
    %v38 = vxor.u32 %v36, %v37
    %v39 = vmul.u32 %v38, 2246822507
    %v40 = vshrl.u32 %v39, 13
    %v41 = vxor.u32 %v39, %v40
    %v42 = vmul.u32 %v41, 3266489909
    %v43 = vshrl.u32 %v42, 16
    %v44 = vxor.u32 %v42, %v43
    %v45 = vand.u32 %v44, 8388607
    %v46 = vor.u32 %v45, 1065353216
    %v48 = vsub.f32 %v46, 1.0
    %v49 = vadd.f32 %v48, 1e-10
    %v50 = vlog2.pop %v49
    %v51 = vmul.f32 %v50, 0.6931472
    %v52 = vsub.f32 1e-10, %v51
    %v53 = vlog2.pop %v52
    %v54 = vmul.f32 %v53, 0.6931472
    %v55 = vsub.f32 0.0, %v54
    %v56 = vadd.f32 %v23, %v55
    %v57 = vshrl.u32 %v25, 4
    %vm58 = vcmp.eq.s32.totalorder %v57, 0
    %v59 = vsel %vm58, %v56, -inf
    %vm60 = vcmask 1042432
    %v61 = vsel %vm60, %v59, -inf
    %62 = vmax.xlane.f32.xlu0 %v61
    %v63 = vpop.xlane.xlu0 %62
    %v64 = vsel %vm58, %v63, 0.0
    %vm65 = vcmp.eq.s32.totalorder %v57, 1
    %v66 = vsel %vm65, %v56, -inf
    %v67 = vsel %vm60, %v66, -inf
    %68 = vmax.xlane.f32.xlu0 %v67
    %v69 = vpop.xlane.xlu0 %68
    %v70 = vsel %vm65, %v69, %v64
    %vm71 = vcmp.eq.s32.totalorder %v57, 2
    %v72 = vsel %vm71, %v56, -inf
    %v73 = vsel %vm60, %v72, -inf
    %74 = vmax.xlane.f32.xlu0 %v73
    %v75 = vpop.xlane.xlu0 %74
    %v76 = vsel %vm71, %v75, %v70
    %vm77 = vcmp.eq.s32.totalorder %v57, 3
    %v78 = vsel %vm77, %v56, -inf
    %v79 = vsel %vm60, %v78, -inf
    %80 = vmax.xlane.f32.xlu0 %v79
    %v81 = vpop.xlane.xlu0 %80
    %v82 = vsel %vm77, %v81, %v76
    %vm83 = vcmp.eq.s32.totalorder %v57, 4
    %v84 = vsel %vm83, %v56, -inf
    %v85 = vsel %vm60, %v84, -inf
    %86 = vmax.xlane.f32.xlu0 %v85
    %v87 = vpop.xlane.xlu0 %86
    %v88 = vsel %vm83, %v87, %v82
    %vm89 = vcmp.eq.s32.totalorder %v57, 5
    %v90 = vsel %vm89, %v56, -inf
    %v91 = vsel %vm60, %v90, -inf
    %92 = vmax.xlane.f32.xlu0 %v91
    %v93 = vpop.xlane.xlu0 %92
    %v94 = vsel %vm89, %v93, %v88
    %vm95 = vcmp.eq.s32.totalorder %v57, 6
    %v96 = vsel %vm95, %v56, -inf
    %v97 = vsel %vm60, %v96, -inf
    %98 = vmax.xlane.f32.xlu0 %v97
    %v99 = vpop.xlane.xlu0 %98
    %v100 = vsel %vm95, %v99, %v94
    %vm101 = vcmp.eq.s32.totalorder %v57, 7
    %v102 = vsel %vm101, %v56, -inf
    %v103 = vsel %vm60, %v102, -inf
    %104 = vmax.xlane.f32.xlu0 %v103
    %v105 = vpop.xlane.xlu0 %104
    %v106 = vsel %vm101, %v105, %v100
    %v107 = vsub.f32 %v56, %v106
    %v108 = vmul.f32 %v107, 1.442695
    %v109 = vpow.pop %v108
    %v110 = vsel %vm58, %v109, 0.0
    %v111 = vsel %vm60, %v110, 0.0
    %112 = vadd.xlane.f32.xlu0 %v111
    %v113 = vpop.xlane.xlu0 %112
    %v114 = vsel %vm58, %v113, 0.0
    %v115 = vsel %vm65, %v109, 0.0
    %v116 = vsel %vm60, %v115, 0.0
    %117 = vadd.xlane.f32.xlu0 %v116
    %v118 = vpop.xlane.xlu0 %117
    %v119 = vsel %vm65, %v118, %v114
    %v120 = vsel %vm71, %v109, 0.0
    %v121 = vsel %vm60, %v120, 0.0
    %122 = vadd.xlane.f32.xlu0 %v121
    %v123 = vpop.xlane.xlu0 %122
    %v124 = vsel %vm71, %v123, %v119
    %v125 = vsel %vm77, %v109, 0.0
    %v126 = vsel %vm60, %v125, 0.0
    %127 = vadd.xlane.f32.xlu0 %v126
    %v128 = vpop.xlane.xlu0 %127
    %v129 = vsel %vm77, %v128, %v124
    %v130 = vsel %vm83, %v109, 0.0
    %v131 = vsel %vm60, %v130, 0.0
    %132 = vadd.xlane.f32.xlu0 %v131
    %v133 = vpop.xlane.xlu0 %132
    %v134 = vsel %vm83, %v133, %v129
    %v135 = vsel %vm89, %v109, 0.0
    %v136 = vsel %vm60, %v135, 0.0
    %137 = vadd.xlane.f32.xlu0 %v136
    %v138 = vpop.xlane.xlu0 %137
    %v139 = vsel %vm89, %v138, %v134
    %v140 = vsel %vm95, %v109, 0.0
    %v141 = vsel %vm60, %v140, 0.0
    %142 = vadd.xlane.f32.xlu0 %v141
    %v143 = vpop.xlane.xlu0 %142
    %v144 = vsel %vm95, %v143, %v139
    %v145 = vsel %vm101, %v109, 0.0
    %v146 = vsel %vm60, %v145, 0.0
    %147 = vadd.xlane.f32.xlu0 %v146
    %v148 = vpop.xlane.xlu0 %147
    %v149 = vsel %vm101, %v148, %v144
    %v150 = vrcp.pop %v149
    %v151 = vmul.f32 %v109, %v150
    %152 = vst [vmem:[#allocation7] sm:$0x7] %v151
    // Predicated region
    $region10: #{tpu_custom_call.1} parent=1 // pred_check
      _
    $region11: #{tpu_custom_call.1} parent=1 // pred_check_branch
      %154 = sbr.rel (0) target = $region13
    $region12: #{tpu_custom_call.1} parent=1 // pred_region
      %s156 = ssub.s32 64, 64
      %157 = vsyncadd [#allocation6], %s156
      %s159 = sshll.u32 [#allocation7], 4
      %s160 = int_to_ptr.vmem [resolvable:$true] %s159
      %162 = dma.vmem_to_hbm [thread:$0]  %s160, 64, %s2, [#allocation6]
    $region13: #{tpu_custom_call.1} parent=1 // pred_fallthru
      _
    // Predicated region
    $region14: #{tpu_custom_call.1} parent=1 // pred_check
      _
    $region15: #{tpu_custom_call.1} parent=1 // pred_check_branch
      %164 = sbr.rel (0) target = $region17
    $region16: #{tpu_custom_call.1} parent=1 // pred_region
      %165 = dma.done [#allocation6], 64
    $region17: #{tpu_custom_call.1} parent=1 // pred_fallthru
      _
    %166 = vsyncpa [#allocation5], 1
    %167 = vsyncpa [#allocation6], 1

</llo_original>
